<compile_context>
chip_gen: v6e
topology: v6e:2x2x1
jax: 0.10.0
libtpu: 0.0.40
codegen_flags: <defaults>
</compile_context>

<pallas_src>
import functools

import jax
import jax.numpy as jnp
from jax.experimental import pallas as pl
from jax.experimental.pallas import tpu as pltpu


def _round_up(x, m):
    return (x + m - 1) // m * m


def ncf_fused_kernel(uid_ref, iid_ref, wt_ref, ht_ref, w1u_ref, w1v_ref,
                     b1_ref, w2_ref, out_ref, *, second_layer_on_mxu):
    """One grid step: block_n samples, batch on lanes.

    uid_ref, iid_ref : (1, block_n) int32       user / item indices
    wt_ref           : (k, num_users_pad) f32   W embedding.T, resident
    ht_ref           : (k, num_items_pad) f32   H embedding.T, resident
    w1u_ref, w1v_ref : (k, k) f32               linear_1 weight split at concat seam
    b1_ref           : (k, 1) f32
    w2_ref           : (k, 1) f32  (or (1, k) when second_layer_on_mxu)
    out_ref          : (1, block_n) f32         lane-dense logits row
    """
    bn = uid_ref.shape[-1]
    nu = wt_ref.shape[-1]
    ni = ht_ref.shape[-1]

    uid = uid_ref[...]                                            # (1, bn) i32
    iid = iid_ref[...]

    # Fused embedding gather: one-hot matmul on the (otherwise idle) MXU.
    #   u[:, n] = W_emb[uid[n], :]  ==  W_emb.T @ onehot(uid)
    rows_u = jax.lax.broadcasted_iota(jnp.int32, (nu, bn), 0)
    rows_i = jax.lax.broadcasted_iota(jnp.int32, (ni, bn), 0)
    oh_u = jnp.where(rows_u == uid, 1.0, 0.0).astype(jnp.float32)   # (nu, bn)
    oh_v = jnp.where(rows_i == iid, 1.0, 0.0).astype(jnp.float32)   # (ni, bn)
    u = jnp.dot(wt_ref[...], oh_u, preferred_element_type=jnp.float32)  # (k, bn)
    v = jnp.dot(ht_ref[...], oh_v, preferred_element_type=jnp.float32)  # (k, bn)

    # linear_1 on concat([U, V]):  W1 @ [u; v] == W1u @ u + W1v @ v.
    # (u, v exist only in VMEM, so no stacked HBM activation stream is needed.)
    h1 = (jnp.dot(w1u_ref[...], u, preferred_element_type=jnp.float32)
          + jnp.dot(w1v_ref[...], v, preferred_element_type=jnp.float32)
          + b1_ref[...])
    h1 = jnp.maximum(h1, 0.0)                                     # ReLU

    # linear_2 (no bias).
    if second_layer_on_mxu:
        # (1, k) @ (k, bn) on the MXU: keeps the VALU/XLU free at large k.
        out_ref[...] = jnp.dot(w2_ref[...], h1,
                               preferred_element_type=jnp.float32)
    else:
        # tiny k: per-sample dot as VPU multiply + sublane reduce.
        out_ref[...] = jnp.sum(h1 * w2_ref[...], axis=0, keepdims=True)


def _choose_block_n(N, k, nu_pad, ni_pad, requested=None):
    """Samples (lanes) per grid step.

    Sized so the in-kernel one-hot ((table_rows, block_n) f32) + activation
    intermediates + double-buffered index/output streams stay well inside the
    scoped VMEM limit, capped at 8192 lanes, and capped so the batch still
    splits into >= 2 'parallel' grid steps (v7x shards them across its two
    TensorCores; a no-op on v5e/v6e).
    """
    if requested is None:
        per_col = 4 * (nu_pad + ni_pad + 3 * max(k, 8)) + 24   # f32 bytes / sample
        budget = 16 * 1024 * 1024
        bn = max(128, budget // per_col // 128 * 128)
        bn = min(bn, 8192)
    else:
        bn = max(128, _round_up(requested, 128))
    bn = min(bn, max(128, _round_up(pl.cdiv(N, 2), 128)))   # keep >= 2 grid steps
    bn = min(bn, _round_up(N, 128))                         # don't over-pad tiny batches
    return bn


def ips_ncf_forward(x_idx, W_emb, H_emb, w1, b1, w2, *, block_n=None):
    """Forward pass of IPS_NCF (is_training=False path).

    x_idx : (N, 2) int user/item index pairs
    W_emb : (num_users, k)    H_emb : (num_items, k)
    w1    : (k, 2k)  torch linear_1.weight      b1 : (k,)
    w2    : (1, k)   torch linear_2.weight (no bias)
    returns (N, 1) float32 logits
    """
    N = x_idx.shape[0]
    num_users, k = W_emb.shape
    num_items = H_emb.shape[0]

    # Lane-align the table "row" axis (it becomes the one-hot contraction dim
    # inside the kernel).  Padded rows are never selected by a valid index.
    nu_pad = _round_up(num_users, 128)
    ni_pad = _round_up(num_items, 128)
    wt = jnp.pad(W_emb.astype(jnp.float32).T, ((0, 0), (0, nu_pad - num_users)))
    ht = jnp.pad(H_emb.astype(jnp.float32).T, ((0, 0), (0, ni_pad - num_items)))

    block_n = _choose_block_n(N, k, nu_pad, ni_pad, block_n)
    n_pad = _round_up(N, block_n)
    grid_n = n_pad // block_n

    # Per-sample HBM traffic: 8 B of indices in, 4 B of logits out.
    # Padding-tail indices are 0 (valid rows); their outputs are sliced off.
    uid = jnp.pad(x_idx[:, 0].astype(jnp.int32), (0, n_pad - N)).reshape(1, n_pad)
    iid = jnp.pad(x_idx[:, 1].astype(jnp.int32), (0, n_pad - N)).reshape(1, n_pad)

    w1 = w1.astype(jnp.float32)
    w1u = w1[:, :k]                                   # acts on U features
    w1v = w1[:, k:]                                   # acts on V features
    b1_col = b1.astype(jnp.float32).reshape(k, 1)

    second_layer_on_mxu = k > 8
    if second_layer_on_mxu:
        w2_arg = w2.astype(jnp.float32).reshape(1, k)
        w2_spec_shape = (1, k)
    else:
        w2_arg = w2.astype(jnp.float32).reshape(k, 1)
        w2_spec_shape = (k, 1)

    kernel = functools.partial(ncf_fused_kernel,
                               second_layer_on_mxu=second_layer_on_mxu)

    out = pl.pallas_call(
        kernel,
        out_shape=jax.ShapeDtypeStruct((1, n_pad), jnp.float32),
        grid_spec=pltpu.PrefetchScalarGridSpec(
            num_scalar_prefetch=0,
            grid=(grid_n,),
            in_specs=[
                pl.BlockSpec((1, block_n), lambda i: (0, i)),    # user idx tile
                pl.BlockSpec((1, block_n), lambda i: (0, i)),    # item idx tile
                pl.BlockSpec((k, nu_pad), lambda i: (0, 0)),     # W_emb.T (resident)
                pl.BlockSpec((k, ni_pad), lambda i: (0, 0)),     # H_emb.T (resident)
                pl.BlockSpec((k, k), lambda i: (0, 0)),          # W1u (resident)
                pl.BlockSpec((k, k), lambda i: (0, 0)),          # W1v (resident)
                pl.BlockSpec((k, 1), lambda i: (0, 0)),          # b1  (resident)
                pl.BlockSpec(w2_spec_shape, lambda i: (0, 0)),   # w2  (resident)
            ],
            # lane-dense output row: unmasked vector stores.
            out_specs=pl.BlockSpec((1, block_n), lambda i: (0, i)),
        ),
        compiler_params=pltpu.CompilerParams(
            dimension_semantics=("parallel",),       # shards over v7x's 2 TCs
            vmem_limit_bytes=48 * 1024 * 1024,       # > v5e 16 MiB default, < v7x 64 MiB
        ),
    )(uid, iid, wt, ht, w1u, w1v, b1_col, w2_arg)

    # (1, n_pad) -> (N, 1), dropping batch padding.
    return out[0, :N].reshape(N, 1)


def init_params(key, num_users, num_items, embedding_k):
    """Deterministic parameter init mimicking PyTorch defaults."""
    k_w, k_h, k_l1w, k_l1b, k_l2w = jax.random.split(key, 5)
    # nn.Embedding: N(0, 1)
    W_emb = jax.random.normal(k_w, (num_users, embedding_k), jnp.float32)
    H_emb = jax.random.normal(k_h, (num_items, embedding_k), jnp.float32)
    # nn.Linear: U(-1/sqrt(fan_in), 1/sqrt(fan_in)), weight stored (out, in)
    fan1 = embedding_k * 2
    bound1 = 1.0 / jnp.sqrt(fan1)
    w1 = jax.random.uniform(k_l1w, (embedding_k, fan1), jnp.float32,
                            -bound1, bound1)
    b1 = jax.random.uniform(k_l1b, (embedding_k,), jnp.float32, -bound1, bound1)
    fan2 = embedding_k
    bound2 = 1.0 / jnp.sqrt(fan2)
    w2 = jax.random.uniform(k_l2w, (1, fan2), jnp.float32, -bound2, bound2)
    return W_emb, H_emb, w1, b1, w2


if __name__ == "__main__":
    num_users, num_items, embedding_k = 50, 60, 4
    batch = 200  # non-multiple of 128: exercises padding; auto block_n=128 -> grid of 2

    key = jax.random.PRNGKey(0)
    key_params, key_u, key_i = jax.random.split(key, 3)

    W_emb, H_emb, w1, b1, w2 = init_params(
        key_params, num_users, num_items, embedding_k)

    user_idx = jax.random.randint(key_u, (batch,), 0, num_users, jnp.int32)
    item_idx = jax.random.randint(key_i, (batch,), 0, num_items, jnp.int32)
    x = jnp.stack([user_idx, item_idx], axis=1)        # (batch, 2)

    out = ips_ncf_forward(x, W_emb, H_emb, w1, b1, w2)
    out = jax.block_until_ready(out)

    # Pure-JAX reference check (same math as the PyTorch module, no Pallas).
    u = jnp.take(W_emb, x[:, 0], axis=0)
    v = jnp.take(H_emb, x[:, 1], axis=0)
    z = jnp.concatenate([u, v], axis=1)
    ref = jnp.maximum(z @ w1.T + b1, 0.0) @ w2.T
    assert out.shape == (batch, 1)
    # Slightly looser than f32-exact to allow for MXU multi-pass f32 accumulation.
    assert jnp.allclose(out, ref, atol=1e-4, rtol=1e-4), \
        float(jnp.max(jnp.abs(out - ref)))

    print("KERNEL_OK")
</pallas_src>

<mosaic_0001>
module attributes {stable_mosaic.version = 11 : i64} {
  func.func @ncf_fused_kernel(%arg0: i32, %arg1: memref<1x128xi32, #tpu.memory_space<vmem>>, %arg2: memref<1x128xi32, #tpu.memory_space<vmem>>, %arg3: memref<4x128xf32, #tpu.memory_space<vmem>>, %arg4: memref<4x128xf32, #tpu.memory_space<vmem>>, %arg5: memref<4x4xf32, #tpu.memory_space<vmem>>, %arg6: memref<4x4xf32, #tpu.memory_space<vmem>>, %arg7: memref<4x1xf32, #tpu.memory_space<vmem>>, %arg8: memref<4x1xf32, #tpu.memory_space<vmem>>, %arg9: memref<1x128xf32, #tpu.memory_space<vmem>>) attributes {dimension_semantics = [#tpu.dimension_semantics<parallel>], iteration_bounds = array<i64: 2>, scalar_prefetch = 0 : i64, scratch_operands = 0 : i64, tpu.core_type = #tpu.core_type<tc>, window_params = [{transform_indices = @transform_0, window_bounds = array<i64: 1, 128>}, {transform_indices = @transform_1, window_bounds = array<i64: 1, 128>}, {pipeline_mode = #tpu.pipeline_mode<synchronous>, transform_indices = @transform_2, window_bounds = array<i64: 4, 128>}, {pipeline_mode = #tpu.pipeline_mode<synchronous>, transform_indices = @transform_3, window_bounds = array<i64: 4, 128>}, {pipeline_mode = #tpu.pipeline_mode<synchronous>, transform_indices = @transform_4, window_bounds = array<i64: 4, 4>}, {pipeline_mode = #tpu.pipeline_mode<synchronous>, transform_indices = @transform_5, window_bounds = array<i64: 4, 4>}, {pipeline_mode = #tpu.pipeline_mode<synchronous>, transform_indices = @transform_6, window_bounds = array<i64: 4, 1>}, {pipeline_mode = #tpu.pipeline_mode<synchronous>, transform_indices = @transform_7, window_bounds = array<i64: 4, 1>}, {transform_indices = @transform_8, window_bounds = array<i64: 1, 128>}]} {
    %c0 = arith.constant 0 : index
    %c0_0 = arith.constant 0 : index
    %0 = vector.load %arg1[%c0, %c0_0] : memref<1x128xi32, #tpu.memory_space<vmem>>, vector<1x128xi32>
    %c0_1 = arith.constant 0 : index
    %c0_2 = arith.constant 0 : index
    %1 = vector.load %arg2[%c0_1, %c0_2] : memref<1x128xi32, #tpu.memory_space<vmem>>, vector<1x128xi32>
    %2 = tpu.iota {dimensions = array<i32: 0>} : vector<128x128xi32>
    %3 = tpu.iota {dimensions = array<i32: 0>} : vector<128x128xi32>
    %4 = vector.broadcast %0 : vector<1x128xi32> to vector<128x128xi32>
    %5 = arith.cmpi eq, %2, %4 : vector<128x128xi32>
    %cst = arith.constant 1.000000e+00 : f32
    %cst_3 = arith.constant 0.000000e+00 : f32
    %6 = vector.broadcast %cst : f32 to vector<128x128xf32>
    %7 = vector.broadcast %cst_3 : f32 to vector<128x128xf32>
    %8 = arith.select %5, %6, %7 : vector<128x128xi1>, vector<128x128xf32>
    %9 = vector.broadcast %1 : vector<1x128xi32> to vector<128x128xi32>
    %10 = arith.cmpi eq, %3, %9 : vector<128x128xi32>
    %cst_4 = arith.constant 1.000000e+00 : f32
    %cst_5 = arith.constant 0.000000e+00 : f32
    %11 = vector.broadcast %cst_4 : f32 to vector<128x128xf32>
    %12 = vector.broadcast %cst_5 : f32 to vector<128x128xf32>
    %13 = arith.select %10, %11, %12 : vector<128x128xi1>, vector<128x128xf32>
    %c0_6 = arith.constant 0 : index
    %c0_7 = arith.constant 0 : index
    %14 = vector.load %arg3[%c0_6, %c0_7] : memref<4x128xf32, #tpu.memory_space<vmem>>, vector<4x128xf32>
    %cst_8 = arith.constant dense<0.000000e+00> : vector<4x128xf32>
    %15 = tpu.matmul %14, %8, %cst_8 {dimension_numbers = #tpu.dot_dimension_numbers<[1], [0], [0], [1], [0, 0, 1, 1], [], []>} : vector<4x128xf32>, vector<128x128xf32>, vector<4x128xf32> -> vector<4x128xf32>
    %c0_9 = arith.constant 0 : index
    %c0_10 = arith.constant 0 : index
    %16 = vector.load %arg4[%c0_9, %c0_10] : memref<4x128xf32, #tpu.memory_space<vmem>>, vector<4x128xf32>
    %cst_11 = arith.constant dense<0.000000e+00> : vector<4x128xf32>
    %17 = tpu.matmul %16, %13, %cst_11 {dimension_numbers = #tpu.dot_dimension_numbers<[1], [0], [0], [1], [0, 0, 1, 1], [], []>} : vector<4x128xf32>, vector<128x128xf32>, vector<4x128xf32> -> vector<4x128xf32>
    %c0_12 = arith.constant 0 : index
    %c0_13 = arith.constant 0 : index
    %18 = vector.load %arg5[%c0_12, %c0_13] : memref<4x4xf32, #tpu.memory_space<vmem>>, vector<4x4xf32>
    %cst_14 = arith.constant dense<0.000000e+00> : vector<4x128xf32>
    %19 = tpu.matmul %18, %15, %cst_14 {dimension_numbers = #tpu.dot_dimension_numbers<[1], [0], [0], [1], [0, 0, 1, 1], [], []>} : vector<4x4xf32>, vector<4x128xf32>, vector<4x128xf32> -> vector<4x128xf32>
    %c0_15 = arith.constant 0 : index
    %c0_16 = arith.constant 0 : index
    %20 = vector.load %arg6[%c0_15, %c0_16] : memref<4x4xf32, #tpu.memory_space<vmem>>, vector<4x4xf32>
    %cst_17 = arith.constant dense<0.000000e+00> : vector<4x128xf32>
    %21 = tpu.matmul %20, %17, %cst_17 {dimension_numbers = #tpu.dot_dimension_numbers<[1], [0], [0], [1], [0, 0, 1, 1], [], []>} : vector<4x4xf32>, vector<4x128xf32>, vector<4x128xf32> -> vector<4x128xf32>
    %22 = arith.addf %19, %21 : vector<4x128xf32>
    %c0_18 = arith.constant 0 : index
    %c0_19 = arith.constant 0 : index
    %23 = vector.load %arg7[%c0_18, %c0_19] : memref<4x1xf32, #tpu.memory_space<vmem>>, vector<4x1xf32>
    %24 = vector.broadcast %23 : vector<4x1xf32> to vector<4x128xf32>
    %25 = arith.addf %22, %24 : vector<4x128xf32>
    %cst_20 = arith.constant 0.000000e+00 : f32
    %26 = vector.broadcast %cst_20 : f32 to vector<4x128xf32>
    %27 = arith.maximumf %25, %26 : vector<4x128xf32>
    %c0_21 = arith.constant 0 : index
    %c0_22 = arith.constant 0 : index
    %28 = vector.load %arg8[%c0_21, %c0_22] : memref<4x1xf32, #tpu.memory_space<vmem>>, vector<4x1xf32>
    %29 = vector.broadcast %28 : vector<4x1xf32> to vector<4x128xf32>
    %30 = arith.mulf %27, %29 : vector<4x128xf32>
    %cst_23 = arith.constant dense<0.000000e+00> : vector<128xf32>
    %31 = vector.multi_reduction <add>, %30, %cst_23 [0] : vector<4x128xf32> to vector<128xf32>
    %32 = vector.shape_cast %31 : vector<128xf32> to vector<1x128xf32>
    %c0_24 = arith.constant 0 : index
    %c0_25 = arith.constant 0 : index
    %33 = vector.load %arg9[%c0_24, %c0_25] : memref<1x128xf32, #tpu.memory_space<vmem>>, vector<1x128xf32>
    tpu.vector_store %arg9[%c0_24, %c0_25], %32 {strides = array<i32>} : memref<1x128xf32, #tpu.memory_space<vmem>>, vector<1x128xf32>,
    return
  }
  func.func @transform_0(%arg0: i32) -> (i32, i32) {
    %c0_i32 = arith.constant 0 : i32
    %c0_i32_0 = arith.constant 0 : i32
    return %c0_i32, %arg0 : i32, i32
  }
  func.func @transform_1(%arg0: i32) -> (i32, i32) {
    %c0_i32 = arith.constant 0 : i32
    %c0_i32_0 = arith.constant 0 : i32
    return %c0_i32, %arg0 : i32, i32
  }
  func.func @transform_2(%arg0: i32) -> (i32, i32) {
    %c0_i32 = arith.constant 0 : i32
    %c0_i32_0 = arith.constant 0 : i32
    %c0_i32_1 = arith.constant 0 : i32
    return %c0_i32, %c0_i32_0 : i32, i32
  }
  func.func @transform_3(%arg0: i32) -> (i32, i32) {
    %c0_i32 = arith.constant 0 : i32
    %c0_i32_0 = arith.constant 0 : i32
    %c0_i32_1 = arith.constant 0 : i32
    return %c0_i32, %c0_i32_0 : i32, i32
  }
  func.func @transform_4(%arg0: i32) -> (i32, i32) {
    %c0_i32 = arith.constant 0 : i32
    %c0_i32_0 = arith.constant 0 : i32
    %c0_i32_1 = arith.constant 0 : i32
    return %c0_i32, %c0_i32_0 : i32, i32
  }
  func.func @transform_5(%arg0: i32) -> (i32, i32) {
    %c0_i32 = arith.constant 0 : i32
    %c0_i32_0 = arith.constant 0 : i32
    %c0_i32_1 = arith.constant 0 : i32
    return %c0_i32, %c0_i32_0 : i32, i32
  }
  func.func @transform_6(%arg0: i32) -> (i32, i32) {
    %c0_i32 = arith.constant 0 : i32
    %c0_i32_0 = arith.constant 0 : i32
    %c0_i32_1 = arith.constant 0 : i32
    return %c0_i32, %c0_i32_0 : i32, i32
  }
  func.func @transform_7(%arg0: i32) -> (i32, i32) {
    %c0_i32 = arith.constant 0 : i32
    %c0_i32_0 = arith.constant 0 : i32
    %c0_i32_1 = arith.constant 0 : i32
    return %c0_i32, %c0_i32_0 : i32, i32
  }
  func.func @transform_8(%arg0: i32) -> (i32, i32) {
    %c0_i32 = arith.constant 0 : i32
    %c0_i32_0 = arith.constant 0 : i32
    return %c0_i32, %arg0 : i32, i32
  }
}

</mosaic_0001>

<llo_original>
// kernel: tpu_custom_call.1
$region0: #{tpu_custom_call.1}
  #allocation0 [shape = 'u32[]', space=smem, size = 0x4, offset = 0x4, fixed_abs, tag = 'smem constant byte address 0x4 - core index']
  #allocation1 [shape = 'u32[144,128]{1,0:T(1,128)}', space=vmem, size = 0x12000, scoped, tag = 'internal scratch']
  %s0 = inlined_call_operand.hbm [shape: s32[1,256], index: 0, kind: input, shape index: {}]
  %s1 = inlined_call_operand.hbm [shape: s32[1,256], index: 1, kind: input, shape index: {}]
  %s2 = inlined_call_operand.vmem [shape: f32[4,128], index: 2, kind: input, shape index: {}]
  %s3 = inlined_call_operand.vmem [shape: f32[4,128], index: 3, kind: input, shape index: {}]
  %s4 = inlined_call_operand.vmem [shape: f32[4,4], index: 4, kind: input, shape index: {}]
  %s5 = inlined_call_operand.vmem [shape: f32[4,4], index: 5, kind: input, shape index: {}]
  %s6 = inlined_call_operand.vmem [shape: f32[4,1], index: 6, kind: input, shape index: {}]
  %s7 = inlined_call_operand.vmem [shape: f32[4,1], index: 7, kind: input, shape index: {}]
  %s8 = inlined_call_operand.hbm [shape: f32[1,256], index: 8, kind: output, shape index: {}]
  %s9 = sld [smem:[#allocation0]]
  $region73: #{tpu_custom_call.1} parent=0
    _
  %s11 = ssub.s32 1, %s9
  %s12 = scalar_select 0, %s11, %s9
  $region1: #{tpu_custom_call.1} parent=0
    #allocation2 [shape = 'u8[1024]{0}', space=vmem, size = 0x400, scoped, tag = 'input window, operand 0']
    #allocation3 [shape = 's32[2]{0}', space=sflag, size = 0x8, scoped, tag = 'scoped memory for tpu_custom_call.1']
    #allocation4 [shape = 's32[2]{0}', space=sflag, size = 0x8, scoped, tag = 'scoped memory for tpu_custom_call.1']
    #allocation5 [shape = 'u8[1024]{0}', space=vmem, size = 0x400, scoped, tag = 'input window, operand 1']
    #allocation6 [shape = 's32[2]{0}', space=sflag, size = 0x8, scoped, tag = 'scoped memory for tpu_custom_call.1']
    #allocation7 [shape = 'u8[1024]{0}', space=vmem, size = 0x400, scoped, tag = 'output window, operand 0']
    %13 = vsyncpa [#allocation3], 0
    %s14 = scalar_lea.sflag [#allocation3], 1
    %15 = vsyncpa %s14, 0
    %16 = vsyncpa [#allocation6], 0
    %s17 = scalar_lea.sflag [#allocation6], 1
    %18 = vsyncpa %s17, 0
    %19 = vsyncpa [#allocation4], 0
    %s20 = scalar_lea.sflag [#allocation4], 1
    %21 = vsyncpa %s20, 0
    loop: start=0, step=1, limit=4
    $region2: #{tpu_custom_call.1} parent=1 // loop_pre_header
      _
    $region3: #{tpu_custom_call.1} parent=1 // loop_header
      %s23 = sphi 0, %s27
      %p24 = scmp.ge.s32.totalorder %s23, 4
      %s33 = sphi 0, %s35
      %s36 = sphi 0, %s33
      %s37 = sphi 0, %s36
      %s53 = sphi 0, %s37
      %s59 = sphi 0, %s61
      %s62 = sphi 0, %s59
      %s63 = sphi 0, %s62
      %s79 = sphi 0, %s63
      %s83 = sphi 0, %s83
      %s85 = sphi 0, %s83
      %s86 = sphi 0, %s85
      %s100 = sphi 0, %s86
      %s104 = sphi 0, %s104
      %s106 = sphi 0, %s104
      %s107 = sphi 0, %s106
      %s121 = sphi 0, %s107
      %s125 = sphi 0, %s125
      %s127 = sphi 0, %s125
      %s128 = sphi 0, %s127
      %s142 = sphi 0, %s128
      %s146 = sphi 0, %s146
      %s148 = sphi 0, %s146
      %s149 = sphi 0, %s148
      %s163 = sphi 0, %s149
      %s167 = sphi 0, %s167
      %s169 = sphi 0, %s167
      %s170 = sphi 0, %s169
      %s184 = sphi 0, %s170
      %s188 = sphi 0, %s188
      %s190 = sphi 0, %s188
      %s191 = sphi 0, %s190
      %s205 = sphi 0, %s191
      %s211 = sphi 0, %s213
      %s214 = sphi 0, %s211
      %s215 = sphi 0, %s214
      %s231 = sphi 0, %s215
    $region4: #{tpu_custom_call.1} parent=1 // loop_header_branch
      %26 = sbr.rel (%p24) target = $region8
    $region5: #{tpu_custom_call.1} parent=1 // loop_body
      %s28 = ssub.s32 %s23, 1
      %s29 = ssub.s32 %s23, 2
      %s30 = sadd.s32 %s23, 1
      %s31 = ssub.s32 %s23, %s30
      %p32 = scmp.eq.s32.totalorder %s31, 0
      %s34 = sadd.s32 %s33, 1
      %s35 = scalar_select %p32, %s33, %s34
      %p38 = pneg %p32
      %p39 = scmp.eq.s32.totalorder %s23, 1
      %p40 = por %p38, %p39
      %p41 = scmp.ne.s32.totalorder %s33, %s36
      %p42 = scmp.eq.s32.totalorder %s23, 0
      %p43 = por %p41, %p42
      %p44 = scmp.ne.s32.totalorder %s33, %s36
      %p45 = scmp.eq.s32.totalorder %s28, 1
      %p46 = por %p44, %p45
      %p47 = scmp.ne.s32.totalorder %s36, %s37
      %p48 = scmp.eq.s32.totalorder %s28, 0
      %p49 = por %p47, %p48
      %p50 = scmp.ne.s32.totalorder %s36, %s37
      %p51 = scmp.eq.s32.totalorder %s29, 1
      %p52 = por %p50, %p51
      %p54 = scmp.ne.s32.totalorder %s37, %s53
      %p55 = scmp.eq.s32.totalorder %s29, 0
      %p56 = por %p54, %p55
      %s57 = ssub.s32 %s23, %s30
      %p58 = scmp.eq.s32.totalorder %s57, 0
      %s60 = sadd.s32 %s59, 1
      %s61 = scalar_select %p58, %s59, %s60
      %p64 = pneg %p58
      %p65 = scmp.eq.s32.totalorder %s23, 1
      %p66 = por %p64, %p65
      %p67 = scmp.ne.s32.totalorder %s59, %s62
      %p68 = scmp.eq.s32.totalorder %s23, 0
      %p69 = por %p67, %p68
      %p70 = scmp.ne.s32.totalorder %s59, %s62
      %p71 = scmp.eq.s32.totalorder %s28, 1
      %p72 = por %p70, %p71
      %p73 = scmp.ne.s32.totalorder %s62, %s63
      %p74 = scmp.eq.s32.totalorder %s28, 0
      %p75 = por %p73, %p74
      %p76 = scmp.ne.s32.totalorder %s62, %s63
      %p77 = scmp.eq.s32.totalorder %s29, 1
      %p78 = por %p76, %p77
      %p80 = scmp.ne.s32.totalorder %s63, %s79
      %p81 = scmp.eq.s32.totalorder %s29, 0
      %p82 = por %p80, %p81
      %s84 = sadd.s32 %s83, 1
      %p87 = scmp.eq.s32.totalorder %s23, 1
      %p88 = scmp.ne.s32.totalorder %s83, %s85
      %p89 = scmp.eq.s32.totalorder %s23, 0
      %p90 = por %p88, %p89
      %p91 = scmp.ne.s32.totalorder %s83, %s85
      %p92 = scmp.eq.s32.totalorder %s28, 1
      %p93 = por %p91, %p92
      %p94 = scmp.ne.s32.totalorder %s85, %s86
      %p95 = scmp.eq.s32.totalorder %s28, 0
      %p96 = por %p94, %p95
      %p97 = scmp.ne.s32.totalorder %s85, %s86
      %p98 = scmp.eq.s32.totalorder %s29, 1
      %p99 = por %p97, %p98
      %p101 = scmp.ne.s32.totalorder %s86, %s100
      %p102 = scmp.eq.s32.totalorder %s29, 0
      %p103 = por %p101, %p102
      %s105 = sadd.s32 %s104, 1
      %p108 = scmp.eq.s32.totalorder %s23, 1
      %p109 = scmp.ne.s32.totalorder %s104, %s106
      %p110 = scmp.eq.s32.totalorder %s23, 0
      %p111 = por %p109, %p110
      %p112 = scmp.ne.s32.totalorder %s104, %s106
      %p113 = scmp.eq.s32.totalorder %s28, 1
      %p114 = por %p112, %p113
      %p115 = scmp.ne.s32.totalorder %s106, %s107
      %p116 = scmp.eq.s32.totalorder %s28, 0
      %p117 = por %p115, %p116
      %p118 = scmp.ne.s32.totalorder %s106, %s107
      %p119 = scmp.eq.s32.totalorder %s29, 1
      %p120 = por %p118, %p119
      %p122 = scmp.ne.s32.totalorder %s107, %s121
      %p123 = scmp.eq.s32.totalorder %s29, 0
      %p124 = por %p122, %p123
      %s126 = sadd.s32 %s125, 1
      %p129 = scmp.eq.s32.totalorder %s23, 1
      %p130 = scmp.ne.s32.totalorder %s125, %s127
      %p131 = scmp.eq.s32.totalorder %s23, 0
      %p132 = por %p130, %p131
      %p133 = scmp.ne.s32.totalorder %s125, %s127
      %p134 = scmp.eq.s32.totalorder %s28, 1
      %p135 = por %p133, %p134
      %p136 = scmp.ne.s32.totalorder %s127, %s128
      %p137 = scmp.eq.s32.totalorder %s28, 0
      %p138 = por %p136, %p137
      %p139 = scmp.ne.s32.totalorder %s127, %s128
      %p140 = scmp.eq.s32.totalorder %s29, 1
      %p141 = por %p139, %p140
      %p143 = scmp.ne.s32.totalorder %s128, %s142
      %p144 = scmp.eq.s32.totalorder %s29, 0
      %p145 = por %p143, %p144
      %s147 = sadd.s32 %s146, 1
      %p150 = scmp.eq.s32.totalorder %s23, 1
      %p151 = scmp.ne.s32.totalorder %s146, %s148
      %p152 = scmp.eq.s32.totalorder %s23, 0
      %p153 = por %p151, %p152
      %p154 = scmp.ne.s32.totalorder %s146, %s148
      %p155 = scmp.eq.s32.totalorder %s28, 1
      %p156 = por %p154, %p155
      %p157 = scmp.ne.s32.totalorder %s148, %s149
      %p158 = scmp.eq.s32.totalorder %s28, 0
      %p159 = por %p157, %p158
      %p160 = scmp.ne.s32.totalorder %s148, %s149
      %p161 = scmp.eq.s32.totalorder %s29, 1
      %p162 = por %p160, %p161
      %p164 = scmp.ne.s32.totalorder %s149, %s163
      %p165 = scmp.eq.s32.totalorder %s29, 0
      %p166 = por %p164, %p165
      %s168 = sadd.s32 %s167, 1
      %p171 = scmp.eq.s32.totalorder %s23, 1
      %p172 = scmp.ne.s32.totalorder %s167, %s169
      %p173 = scmp.eq.s32.totalorder %s23, 0
      %p174 = por %p172, %p173
      %p175 = scmp.ne.s32.totalorder %s167, %s169
      %p176 = scmp.eq.s32.totalorder %s28, 1
      %p177 = por %p175, %p176
      %p178 = scmp.ne.s32.totalorder %s169, %s170
      %p179 = scmp.eq.s32.totalorder %s28, 0
      %p180 = por %p178, %p179
      %p181 = scmp.ne.s32.totalorder %s169, %s170
      %p182 = scmp.eq.s32.totalorder %s29, 1
      %p183 = por %p181, %p182
      %p185 = scmp.ne.s32.totalorder %s170, %s184
      %p186 = scmp.eq.s32.totalorder %s29, 0
      %p187 = por %p185, %p186
      %s189 = sadd.s32 %s188, 1
      %p192 = scmp.eq.s32.totalorder %s23, 1
      %p193 = scmp.ne.s32.totalorder %s188, %s190
      %p194 = scmp.eq.s32.totalorder %s23, 0
      %p195 = por %p193, %p194
      %p196 = scmp.ne.s32.totalorder %s188, %s190
      %p197 = scmp.eq.s32.totalorder %s28, 1
      %p198 = por %p196, %p197
      %p199 = scmp.ne.s32.totalorder %s190, %s191
      %p200 = scmp.eq.s32.totalorder %s28, 0
      %p201 = por %p199, %p200
      %p202 = scmp.ne.s32.totalorder %s190, %s191
      %p203 = scmp.eq.s32.totalorder %s29, 1
      %p204 = por %p202, %p203
      %p206 = scmp.ne.s32.totalorder %s191, %s205
      %p207 = scmp.eq.s32.totalorder %s29, 0
      %p208 = por %p206, %p207
      %s209 = ssub.s32 %s23, %s30
      %p210 = scmp.eq.s32.totalorder %s209, 0
      %s212 = sadd.s32 %s211, 1
      %s213 = scalar_select %p210, %s211, %s212
      %p216 = pneg %p210
      %p217 = scmp.eq.s32.totalorder %s23, 1
      %p218 = por %p216, %p217
      %p219 = scmp.ne.s32.totalorder %s211, %s214
      %p220 = scmp.eq.s32.totalorder %s23, 0
      %p221 = por %p219, %p220
      %p222 = scmp.ne.s32.totalorder %s211, %s214
      %p223 = scmp.eq.s32.totalorder %s28, 1
      %p224 = por %p222, %p223
      %p225 = scmp.ne.s32.totalorder %s214, %s215
      %p226 = scmp.eq.s32.totalorder %s28, 0
      %p227 = por %p225, %p226
      %p228 = scmp.ne.s32.totalorder %s214, %s215
      %p229 = scmp.eq.s32.totalorder %s29, 1
      %p230 = por %p228, %p229
      %p232 = scmp.ne.s32.totalorder %s215, %s231
      %p233 = scmp.eq.s32.totalorder %s29, 0
      %p234 = por %p232, %p233
      %p235 = scmp.le.s32.totalorder 1, %s23
      %p236 = scmp.lt.s32.totalorder %s23, 3
      %p237 = pnand %p235, %p236
      %p238 = pneg %p237
      // Predicated region
      $region9: #{tpu_custom_call.1} parent=5 // pred_check
        _
      $region10: #{tpu_custom_call.1} parent=5 // pred_check_branch
        %240 = sbr.rel (%p237) target = $region12
      $region11: #{tpu_custom_call.1} parent=5 // pred_region
        %s241 = ssub.s32 %s23, 1
        // Predicated region
        $region13: #{tpu_custom_call.1} parent=11 // pred_check
          %p242 = pneg %p96
        $region14: #{tpu_custom_call.1} parent=11 // pred_check_branch
          %244 = sbr.rel (%p242) target = $region16
        $region15: #{tpu_custom_call.1} parent=11 // pred_region
          _
        $region16: #{tpu_custom_call.1} parent=11 // pred_fallthru
          _
        // Predicated region
        $region17: #{tpu_custom_call.1} parent=11 // pred_check
          %p245 = pneg %p117
        $region18: #{tpu_custom_call.1} parent=11 // pred_check_branch
          %247 = sbr.rel (%p245) target = $region20
        $region19: #{tpu_custom_call.1} parent=11 // pred_region
          _
        $region20: #{tpu_custom_call.1} parent=11 // pred_fallthru
          _
        // Predicated region
        $region21: #{tpu_custom_call.1} parent=11 // pred_check
          %p248 = pneg %p138
        $region22: #{tpu_custom_call.1} parent=11 // pred_check_branch
          %250 = sbr.rel (%p248) target = $region24
        $region23: #{tpu_custom_call.1} parent=11 // pred_region
          _
        $region24: #{tpu_custom_call.1} parent=11 // pred_fallthru
          _
        // Predicated region
        $region25: #{tpu_custom_call.1} parent=11 // pred_check
          %p251 = pneg %p159
        $region26: #{tpu_custom_call.1} parent=11 // pred_check_branch
          %253 = sbr.rel (%p251) target = $region28
        $region27: #{tpu_custom_call.1} parent=11 // pred_region
          _
        $region28: #{tpu_custom_call.1} parent=11 // pred_fallthru
          _
        // Predicated region
        $region29: #{tpu_custom_call.1} parent=11 // pred_check
          %p254 = pneg %p180
        $region30: #{tpu_custom_call.1} parent=11 // pred_check_branch
          %256 = sbr.rel (%p254) target = $region32
        $region31: #{tpu_custom_call.1} parent=11 // pred_region
          _
        $region32: #{tpu_custom_call.1} parent=11 // pred_fallthru
          _
        // Predicated region
        $region33: #{tpu_custom_call.1} parent=11 // pred_check
          %p257 = pneg %p201
        $region34: #{tpu_custom_call.1} parent=11 // pred_check_branch
          %259 = sbr.rel (%p257) target = $region36
        $region35: #{tpu_custom_call.1} parent=11 // pred_region
          _
        $region36: #{tpu_custom_call.1} parent=11 // pred_fallthru
          _
      $region12: #{tpu_custom_call.1} parent=5 // pred_fallthru
        _
      %p260 = scmp.lt.s32.totalorder %s23, 2
      // Predicated region
      $region37: #{tpu_custom_call.1} parent=5 // pred_check
        %p261 = pneg %p260
      $region38: #{tpu_custom_call.1} parent=5 // pred_check_branch
        %263 = sbr.rel (%p261) target = $region40
      $region39: #{tpu_custom_call.1} parent=5 // pred_region
        // Predicated region
        $region41: #{tpu_custom_call.1} parent=39 // pred_check
          %p264 = pneg %p43
        $region42: #{tpu_custom_call.1} parent=39 // pred_check_branch
          %266 = sbr.rel (%p264) target = $region44
        $region43: #{tpu_custom_call.1} parent=39 // pred_region
          %s267 = sand.u32 %s33, 1
          %s268 = scalar_lea.sflag [#allocation3], %s267
          %s269 = sand.u32 %s33, 1
          %s270 = scalar_lea.vmem [#allocation2], %s269
          %s272 = ssub.s32 16, 16
          %273 = vsyncadd %s268, %s272
          %s274 = smul.addr %s23, 16
          %s275 = scalar_lea.hbm %s0, %s274
          %s277 = sshll.u32 %s270, 4
          %s278 = int_to_ptr.vmem [resolvable:$true] %s277
          %280 = dma.hbm_to_vmem [thread:$0]  %s275, 16, %s278, %s268
        $region44: #{tpu_custom_call.1} parent=39 // pred_fallthru
          _
        // Predicated region
        $region45: #{tpu_custom_call.1} parent=39 // pred_check
          %p281 = pneg %p69
        $region46: #{tpu_custom_call.1} parent=39 // pred_check_branch
          %283 = sbr.rel (%p281) target = $region48
        $region47: #{tpu_custom_call.1} parent=39 // pred_region
          %s284 = sand.u32 %s59, 1
          %s285 = scalar_lea.sflag [#allocation6], %s284
          %s286 = sand.u32 %s59, 1
          %s287 = scalar_lea.vmem [#allocation5], %s286
          %s289 = ssub.s32 16, 16
          %290 = vsyncadd %s285, %s289
          %s291 = smul.addr %s23, 16
          %s292 = scalar_lea.hbm %s1, %s291
          %s294 = sshll.u32 %s287, 4
          %s295 = int_to_ptr.vmem [resolvable:$true] %s294
          %297 = dma.hbm_to_vmem [thread:$0]  %s292, 16, %s295, %s285
        $region48: #{tpu_custom_call.1} parent=39 // pred_fallthru
          _
      $region40: #{tpu_custom_call.1} parent=5 // pred_fallthru
        _
      %p298 = scmp.le.s32.totalorder 1, %s23
      %p299 = scmp.lt.s32.totalorder %s23, 3
      %p300 = pnand %p298, %p299
      %p301 = pneg %p300
      // Predicated region
      $region49: #{tpu_custom_call.1} parent=5 // pred_check
        _
      $region50: #{tpu_custom_call.1} parent=5 // pred_check_branch
        %303 = sbr.rel (%p300) target = $region52
      $region51: #{tpu_custom_call.1} parent=5 // pred_region
        %s304 = ssub.s32 %s23, 1
        %s305 = sand.u32 %s36, 1
        %s306 = scalar_lea.sflag [#allocation3], %s305
        %s307 = sand.u32 %s36, 1
        %s308 = scalar_lea.vmem [#allocation2], %s307
        // Predicated region
        $region53: #{tpu_custom_call.1} parent=51 // pred_check
          %p309 = pneg %p49
        $region54: #{tpu_custom_call.1} parent=51 // pred_check_branch
          %311 = sbr.rel (%p309) target = $region56
        $region55: #{tpu_custom_call.1} parent=51 // pred_region
          %312 = dma.done %s306, 16
        $region56: #{tpu_custom_call.1} parent=51 // pred_fallthru
          _
        %s313 = sand.u32 %s62, 1
        %s314 = scalar_lea.sflag [#allocation6], %s313
        %s315 = sand.u32 %s62, 1
        %s316 = scalar_lea.vmem [#allocation5], %s315
        // Predicated region
        $region57: #{tpu_custom_call.1} parent=51 // pred_check
          %p317 = pneg %p75
        $region58: #{tpu_custom_call.1} parent=51 // pred_check_branch
          %319 = sbr.rel (%p317) target = $region60
        $region59: #{tpu_custom_call.1} parent=51 // pred_region
          %320 = dma.done %s314, 16
        $region60: #{tpu_custom_call.1} parent=51 // pred_fallthru
          _
        %s321 = sand.u32 %s36, 1
        %s322 = scalar_lea.sflag [#allocation3], %s321
        %s323 = sand.u32 %s36, 1
        %s324 = scalar_lea.vmem [#allocation2], %s323
        %p325 = pneg %p49
        %p326 = pneg %p46
        %s327 = sand.u32 %s62, 1
        %s328 = scalar_lea.sflag [#allocation6], %s327
        %s329 = sand.u32 %s62, 1
        %s330 = scalar_lea.vmem [#allocation5], %s329
        %p331 = pneg %p75
        %p332 = pneg %p72
        %p333 = pneg %p96
        %p334 = pneg %p93
        %p335 = pneg %p117
        %p336 = pneg %p114
        %p337 = pneg %p138
        %p338 = pneg %p135
        %p339 = pneg %p159
        %p340 = pneg %p156
        %p341 = pneg %p180
        %p342 = pneg %p177
        %p343 = pneg %p201
        %p344 = pneg %p198
        %p345 = pneg %p227
        %p346 = pneg %p224
        %s347 = sand.u32 %s214, 1
        %s348 = scalar_lea.sflag [#allocation4], %s347
        %s349 = sand.u32 %s214, 1
        %s350 = scalar_lea.vmem [#allocation7], %s349
        %v351 = vld [vmem:[%s308] sm:$0x1]
        %v352 = vld [vmem:[%s316] sm:$0x1]
        %v353 = vlaneseq
        %v354 = vshrl.u32 %v353, 7
        %v355 = vadd.s32 %v354, 8
        %v356 = vadd.s32 %v354, 16
        %v357 = vadd.s32 %v354, 24
        %v358 = vadd.s32 %v354, 32
        %v359 = vadd.s32 %v354, 40
        %v360 = vadd.s32 %v354, 48
        %v361 = vadd.s32 %v354, 56
        %v362 = vadd.s32 %v354, 64
        %v363 = vadd.s32 %v354, 72
        %v364 = vadd.s32 %v354, 80
        %v365 = vadd.s32 %v354, 88
        %v366 = vadd.s32 %v354, 96
        %v367 = vadd.s32 %v354, 104
        %v368 = vadd.s32 %v354, 112
        %v369 = vadd.s32 %v354, 120
        %v370 = vlaneseq
        %v371 = vshrl.u32 %v370, 7
        %v372 = vsub.s32 0, %v371
        %v373 = vrot.slane %v351, %v372
        %vm374 = vcmp.eq.s32.totalorder %v354, %v373
        %vm375 = vcmp.eq.s32.totalorder %v355, %v373
        %vm376 = vcmp.eq.s32.totalorder %v356, %v373
        %vm377 = vcmp.eq.s32.totalorder %v357, %v373
        %vm378 = vcmp.eq.s32.totalorder %v358, %v373
        %vm379 = vcmp.eq.s32.totalorder %v359, %v373
        %vm380 = vcmp.eq.s32.totalorder %v360, %v373
        %vm381 = vcmp.eq.s32.totalorder %v361, %v373
        %vm382 = vcmp.eq.s32.totalorder %v362, %v373
        %vm383 = vcmp.eq.s32.totalorder %v363, %v373
        %vm384 = vcmp.eq.s32.totalorder %v364, %v373
        %vm385 = vcmp.eq.s32.totalorder %v365, %v373
        %vm386 = vcmp.eq.s32.totalorder %v366, %v373
        %vm387 = vcmp.eq.s32.totalorder %v367, %v373
        %vm388 = vcmp.eq.s32.totalorder %v368, %v373
        %vm389 = vcmp.eq.s32.totalorder %v369, %v373
        %v390 = vsel %vm374, 1.0, 0.0
        %v391 = vsel %vm375, 1.0, 0.0
        %v392 = vsel %vm376, 1.0, 0.0
        %v393 = vsel %vm377, 1.0, 0.0
        %v394 = vsel %vm378, 1.0, 0.0
        %v395 = vsel %vm379, 1.0, 0.0
        %v396 = vsel %vm380, 1.0, 0.0
        %v397 = vsel %vm381, 1.0, 0.0
        %v398 = vsel %vm382, 1.0, 0.0
        %v399 = vsel %vm383, 1.0, 0.0
        %v400 = vsel %vm384, 1.0, 0.0
        %v401 = vsel %vm385, 1.0, 0.0
        %v402 = vsel %vm386, 1.0, 0.0
        %v403 = vsel %vm387, 1.0, 0.0
        %v404 = vsel %vm388, 1.0, 0.0
        %v405 = vsel %vm389, 1.0, 0.0
        %v406 = vlaneseq
        %v407 = vshrl.u32 %v406, 7
        %v408 = vsub.s32 0, %v407
        %v409 = vrot.slane %v352, %v408
        %vm410 = vcmp.eq.s32.totalorder %v354, %v409
        %vm411 = vcmp.eq.s32.totalorder %v355, %v409
        %vm412 = vcmp.eq.s32.totalorder %v356, %v409
        %vm413 = vcmp.eq.s32.totalorder %v357, %v409
        %vm414 = vcmp.eq.s32.totalorder %v358, %v409
        %vm415 = vcmp.eq.s32.totalorder %v359, %v409
        %vm416 = vcmp.eq.s32.totalorder %v360, %v409
        %vm417 = vcmp.eq.s32.totalorder %v361, %v409
        %vm418 = vcmp.eq.s32.totalorder %v362, %v409
        %vm419 = vcmp.eq.s32.totalorder %v363, %v409
        %vm420 = vcmp.eq.s32.totalorder %v364, %v409
        %vm421 = vcmp.eq.s32.totalorder %v365, %v409
        %vm422 = vcmp.eq.s32.totalorder %v366, %v409
        %vm423 = vcmp.eq.s32.totalorder %v367, %v409
        %vm424 = vcmp.eq.s32.totalorder %v368, %v409
        %vm425 = vcmp.eq.s32.totalorder %v369, %v409
        %v426 = vsel %vm410, 1.0, 0.0
        %v427 = vsel %vm411, 1.0, 0.0
        %v428 = vsel %vm412, 1.0, 0.0
        %v429 = vsel %vm413, 1.0, 0.0
        %v430 = vsel %vm414, 1.0, 0.0
        %v431 = vsel %vm415, 1.0, 0.0
        %v432 = vsel %vm416, 1.0, 0.0
        %v433 = vsel %vm417, 1.0, 0.0
        %v434 = vsel %vm418, 1.0, 0.0
        %v435 = vsel %vm419, 1.0, 0.0
        %v436 = vsel %vm420, 1.0, 0.0
        %v437 = vsel %vm421, 1.0, 0.0
        %v438 = vsel %vm422, 1.0, 0.0
        %v439 = vsel %vm423, 1.0, 0.0
        %v440 = vsel %vm424, 1.0, 0.0
        %v441 = vsel %vm425, 1.0, 0.0
        %v442 = vld [vmem:[%s2] sm:$0xf]
        %443 = vmatprep.subr.mxu0 0.0
        %444 = vmatpush1.msra.mxu0 %v405
        %445 = vmatprep.subr.mxu0 0.0
        %446 = vmatpush1.msra.mxu0 %v404
        %447 = vmatprep.subr.mxu0 0.0
        %448 = vmatpush1.msra.mxu0 %v403
        %449 = vmatprep.subr.mxu0 0.0
        %450 = vmatpush1.msra.mxu0 %v402
        %451 = vmatprep.subr.mxu0 0.0
        %452 = vmatpush1.msra.mxu0 %v401
        %453 = vmatprep.subr.mxu0 0.0
        %454 = vmatpush1.msra.mxu0 %v400
        %455 = vmatprep.subr.mxu0 0.0
        %456 = vmatpush1.msra.mxu0 %v399
        %457 = vmatprep.subr.mxu0 0.0
        %458 = vmatpush1.msra.mxu0 %v398
        %459 = vmatprep.subr.mxu0 0.0
        %460 = vmatpush1.msra.mxu0 %v397
        %461 = vmatprep.subr.mxu0 0.0
        %462 = vmatpush1.msra.mxu0 %v396
        %463 = vmatprep.subr.mxu0 0.0
        %464 = vmatpush1.msra.mxu0 %v395
        %465 = vmatprep.subr.mxu0 0.0
        %466 = vmatpush1.msra.mxu0 %v394
        %467 = vmatprep.subr.mxu0 0.0
        %468 = vmatpush1.msra.mxu0 %v393
        %469 = vmatprep.subr.mxu0 0.0
        %470 = vmatpush1.msra.mxu0 %v392
        %471 = vmatprep.subr.mxu0 0.0
        %472 = vmatpush1.msra.mxu0 %v391
        %473 = vmatprep.subr.mxu0 0.0
        %474 = vmatpush1.msra.mxu0 %v390
        %475 = vmatprep.subr.mxu0 0.0
        %476 = vmatpush2.msra.mxu0 0.0
        %477 = vmatprep.subr.mxu0 0.0
        %478 = vmatpush2.msra.mxu0 0.0
        %479 = vmatprep.subr.mxu0 0.0
        %480 = vmatpush2.msra.mxu0 0.0
        %481 = vmatprep.subr.mxu0 0.0
        %482 = vmatpush2.msra.mxu0 0.0
        %483 = vmatprep.subr.mxu0 0.0
        %484 = vmatpush2.msra.mxu0 0.0
        %485 = vmatprep.subr.mxu0 0.0
        %486 = vmatpush2.msra.mxu0 0.0
        %487 = vmatprep.subr.mxu0 0.0
        %488 = vmatpush2.msra.mxu0 0.0
        %489 = vmatprep.subr.mxu0 0.0
        %490 = vmatpush2.msra.mxu0 0.0
        %491 = vmatprep.subr.mxu0 0.0
        %492 = vmatpush2.msra.mxu0 0.0
        %493 = vmatprep.subr.mxu0 0.0
        %494 = vmatpush2.msra.mxu0 0.0
        %495 = vmatprep.subr.mxu0 0.0
        %496 = vmatpush2.msra.mxu0 0.0
        %497 = vmatprep.subr.mxu0 0.0
        %498 = vmatpush2.msra.mxu0 0.0
        %499 = vmatprep.subr.mxu0 0.0
        %500 = vmatpush2.msra.mxu0 0.0
        %501 = vmatprep.subr.mxu0 0.0
        %502 = vmatpush2.msra.mxu0 0.0
        %503 = vmatprep.subr.mxu0 0.0
        %504 = vmatpush2.msra.mxu0 0.0
        %505 = vmatprep.subr.mxu0 0.0
        %506 = vmatpush2.msra.mxu0 0.0
        %507 = vmatprep.mubr.f32.mxu0 0.0
        %508 = vmatmul.mubr.f32.gmra.mxu0 %v442
        %v509 = vpop.f32.mrf.mxu0
        %v510 = vadd.f32 0.0, %v509
        %v511 = vpop.f32.mrf.mxu0
        %512 = vdwg.mxu0
        %v513 = vld [vmem:[%s3] sm:$0xf]
        %514 = vmatprep.subr.mxu0 0.0
        %515 = vmatpush1.msra.mxu0 %v441
        %516 = vmatprep.subr.mxu0 0.0
        %517 = vmatpush1.msra.mxu0 %v440
        %518 = vmatprep.subr.mxu0 0.0
        %519 = vmatpush1.msra.mxu0 %v439
        %520 = vmatprep.subr.mxu0 0.0
        %521 = vmatpush1.msra.mxu0 %v438
        %522 = vmatprep.subr.mxu0 0.0
        %523 = vmatpush1.msra.mxu0 %v437
        %524 = vmatprep.subr.mxu0 0.0
        %525 = vmatpush1.msra.mxu0 %v436
        %526 = vmatprep.subr.mxu0 0.0
        %527 = vmatpush1.msra.mxu0 %v435
        %528 = vmatprep.subr.mxu0 0.0
        %529 = vmatpush1.msra.mxu0 %v434
        %530 = vmatprep.subr.mxu0 0.0
        %531 = vmatpush1.msra.mxu0 %v433
        %532 = vmatprep.subr.mxu0 0.0
        %533 = vmatpush1.msra.mxu0 %v432
        %534 = vmatprep.subr.mxu0 0.0
        %535 = vmatpush1.msra.mxu0 %v431
        %536 = vmatprep.subr.mxu0 0.0
        %537 = vmatpush1.msra.mxu0 %v430
        %538 = vmatprep.subr.mxu0 0.0
        %539 = vmatpush1.msra.mxu0 %v429
        %540 = vmatprep.subr.mxu0 0.0
        %541 = vmatpush1.msra.mxu0 %v428
        %542 = vmatprep.subr.mxu0 0.0
        %543 = vmatpush1.msra.mxu0 %v427
        %544 = vmatprep.subr.mxu0 0.0
        %545 = vmatpush1.msra.mxu0 %v426
        %546 = vmatprep.subr.mxu0 0.0
        %547 = vmatpush2.msra.mxu0 0.0
        %548 = vmatprep.subr.mxu0 0.0
        %549 = vmatpush2.msra.mxu0 0.0
        %550 = vmatprep.subr.mxu0 0.0
        %551 = vmatpush2.msra.mxu0 0.0
        %552 = vmatprep.subr.mxu0 0.0
        %553 = vmatpush2.msra.mxu0 0.0
        %554 = vmatprep.subr.mxu0 0.0
        %555 = vmatpush2.msra.mxu0 0.0
        %556 = vmatprep.subr.mxu0 0.0
        %557 = vmatpush2.msra.mxu0 0.0
        %558 = vmatprep.subr.mxu0 0.0
        %559 = vmatpush2.msra.mxu0 0.0
        %560 = vmatprep.subr.mxu0 0.0
        %561 = vmatpush2.msra.mxu0 0.0
        %562 = vmatprep.subr.mxu0 0.0
        %563 = vmatpush2.msra.mxu0 0.0
        %564 = vmatprep.subr.mxu0 0.0
        %565 = vmatpush2.msra.mxu0 0.0
        %566 = vmatprep.subr.mxu0 0.0
        %567 = vmatpush2.msra.mxu0 0.0
        %568 = vmatprep.subr.mxu0 0.0
        %569 = vmatpush2.msra.mxu0 0.0
        %570 = vmatprep.subr.mxu0 0.0
        %571 = vmatpush2.msra.mxu0 0.0
        %572 = vmatprep.subr.mxu0 0.0
        %573 = vmatpush2.msra.mxu0 0.0
        %574 = vmatprep.subr.mxu0 0.0
        %575 = vmatpush2.msra.mxu0 0.0
        %576 = vmatprep.subr.mxu0 0.0
        %577 = vmatpush2.msra.mxu0 0.0
        %578 = vmatprep.mubr.f32.mxu0 0.0
        %579 = vmatmul.mubr.f32.gmra.mxu0 %v513
        %v580 = vpop.f32.mrf.mxu0
        %v581 = vadd.f32 0.0, %v580
        %v582 = vpop.f32.mrf.mxu0
        %583 = vdwg.mxu0
        %v584 = vld [vmem:[%s4] sm:$0xf]
        %v585 = vld [vmem:[%s5] sm:$0xf]
        %vm586 = vcmask 31744
        %v588 = vsel %vm586, %v585, 0
        %vm590 = vcmask 1043456
        %v592 = vsel %vm590, %v581, 0
        %594 = vmatprep.subr.mxu0 0.0
        %595 = vmatpush1.msra.mxu0 0.0
        %596 = vmatprep.subr.mxu0 0.0
        %597 = vmatpush1.msra.mxu0 0.0
        %598 = vmatprep.subr.mxu0 0.0
        %599 = vmatpush1.msra.mxu0 0.0
        %600 = vmatprep.subr.mxu0 0.0
        %601 = vmatpush1.msra.mxu0 0.0
        %602 = vmatprep.subr.mxu0 0.0
        %603 = vmatpush1.msra.mxu0 0.0
        %604 = vmatprep.subr.mxu0 0.0
        %605 = vmatpush1.msra.mxu0 0.0
        %606 = vmatprep.subr.mxu0 0.0
        %607 = vmatpush1.msra.mxu0 0.0
        %608 = vmatprep.subr.mxu0 0.0
        %609 = vmatpush1.msra.mxu0 0.0
        %610 = vmatprep.subr.mxu0 0.0
        %611 = vmatpush1.msra.mxu0 0.0
        %612 = vmatprep.subr.mxu0 0.0
        %613 = vmatpush1.msra.mxu0 0.0
        %614 = vmatprep.subr.mxu0 0.0
        %615 = vmatpush1.msra.mxu0 0.0
        %616 = vmatprep.subr.mxu0 0.0
        %617 = vmatpush1.msra.mxu0 0.0
        %618 = vmatprep.subr.mxu0 0.0
        %619 = vmatpush1.msra.mxu0 0.0
        %620 = vmatprep.subr.mxu0 0.0
        %621 = vmatpush1.msra.mxu0 0.0
        %622 = vmatprep.subr.mxu0 0.0
        %623 = vmatpush1.msra.mxu0 0.0
        %624 = vmatprep.subr.mxu0 0.0
        %625 = vmatpush1.msra.mxu0 %v592
        %626 = vmatprep.subr.mxu0 0.0
        %627 = vmatpush2.msra.mxu0 0.0
        %628 = vmatprep.subr.mxu0 0.0
        %629 = vmatpush2.msra.mxu0 0.0
        %630 = vmatprep.subr.mxu0 0.0
        %631 = vmatpush2.msra.mxu0 0.0
        %632 = vmatprep.subr.mxu0 0.0
        %633 = vmatpush2.msra.mxu0 0.0
        %634 = vmatprep.subr.mxu0 0.0
        %635 = vmatpush2.msra.mxu0 0.0
        %636 = vmatprep.subr.mxu0 0.0
        %637 = vmatpush2.msra.mxu0 0.0
        %638 = vmatprep.subr.mxu0 0.0
        %639 = vmatpush2.msra.mxu0 0.0
        %640 = vmatprep.subr.mxu0 0.0
        %641 = vmatpush2.msra.mxu0 0.0
        %642 = vmatprep.subr.mxu0 0.0
        %643 = vmatpush2.msra.mxu0 0.0
        %644 = vmatprep.subr.mxu0 0.0
        %645 = vmatpush2.msra.mxu0 0.0
        %646 = vmatprep.subr.mxu0 0.0
        %647 = vmatpush2.msra.mxu0 0.0
        %648 = vmatprep.subr.mxu0 0.0
        %649 = vmatpush2.msra.mxu0 0.0
        %650 = vmatprep.subr.mxu0 0.0
        %651 = vmatpush2.msra.mxu0 0.0
        %652 = vmatprep.subr.mxu0 0.0
        %653 = vmatpush2.msra.mxu0 0.0
        %654 = vmatprep.subr.mxu0 0.0
        %655 = vmatpush2.msra.mxu0 0.0
        %656 = vmatprep.subr.mxu0 0.0
        %657 = vmatpush2.msra.mxu0 0.0
        %658 = vmatprep.mubr.f32.mxu0 0.0
        %659 = vmatmul.mubr.f32.gmra.mxu0 %v588
        %v660 = vpop.f32.mrf.mxu0
        %v661 = vadd.f32 0.0, %v660
        %v662 = vpop.f32.mrf.mxu0
        %663 = vdwg.mxu0
        %v665 = vsel %vm586, %v584, 0
        %v668 = vsel %vm590, %v510, 0
        %670 = vmatprep.subr.mxu0 0.0
        %671 = vmatpush1.msra.mxu0 0.0
        %672 = vmatprep.subr.mxu0 0.0
        %673 = vmatpush1.msra.mxu0 0.0
        %674 = vmatprep.subr.mxu0 0.0
        %675 = vmatpush1.msra.mxu0 0.0
        %676 = vmatprep.subr.mxu0 0.0
        %677 = vmatpush1.msra.mxu0 0.0
        %678 = vmatprep.subr.mxu0 0.0
        %679 = vmatpush1.msra.mxu0 0.0
        %680 = vmatprep.subr.mxu0 0.0
        %681 = vmatpush1.msra.mxu0 0.0
        %682 = vmatprep.subr.mxu0 0.0
        %683 = vmatpush1.msra.mxu0 0.0
        %684 = vmatprep.subr.mxu0 0.0
        %685 = vmatpush1.msra.mxu0 0.0
        %686 = vmatprep.subr.mxu0 0.0
        %687 = vmatpush1.msra.mxu0 0.0
        %688 = vmatprep.subr.mxu0 0.0
        %689 = vmatpush1.msra.mxu0 0.0
        %690 = vmatprep.subr.mxu0 0.0
        %691 = vmatpush1.msra.mxu0 0.0
        %692 = vmatprep.subr.mxu0 0.0
        %693 = vmatpush1.msra.mxu0 0.0
        %694 = vmatprep.subr.mxu0 0.0
        %695 = vmatpush1.msra.mxu0 0.0
        %696 = vmatprep.subr.mxu0 0.0
        %697 = vmatpush1.msra.mxu0 0.0
        %698 = vmatprep.subr.mxu0 0.0
        %699 = vmatpush1.msra.mxu0 0.0
        %700 = vmatprep.subr.mxu0 0.0
        %701 = vmatpush1.msra.mxu0 %v668
        %702 = vmatprep.subr.mxu0 0.0
        %703 = vmatpush2.msra.mxu0 0.0
        %704 = vmatprep.subr.mxu0 0.0
        %705 = vmatpush2.msra.mxu0 0.0
        %706 = vmatprep.subr.mxu0 0.0
        %707 = vmatpush2.msra.mxu0 0.0
        %708 = vmatprep.subr.mxu0 0.0
        %709 = vmatpush2.msra.mxu0 0.0
        %710 = vmatprep.subr.mxu0 0.0
        %711 = vmatpush2.msra.mxu0 0.0
        %712 = vmatprep.subr.mxu0 0.0
        %713 = vmatpush2.msra.mxu0 0.0
        %714 = vmatprep.subr.mxu0 0.0
        %715 = vmatpush2.msra.mxu0 0.0
        %716 = vmatprep.subr.mxu0 0.0
        %717 = vmatpush2.msra.mxu0 0.0
        %718 = vmatprep.subr.mxu0 0.0
        %719 = vmatpush2.msra.mxu0 0.0
        %720 = vmatprep.subr.mxu0 0.0
        %721 = vmatpush2.msra.mxu0 0.0
        %722 = vmatprep.subr.mxu0 0.0
        %723 = vmatpush2.msra.mxu0 0.0
        %724 = vmatprep.subr.mxu0 0.0
        %725 = vmatpush2.msra.mxu0 0.0
        %726 = vmatprep.subr.mxu0 0.0
        %727 = vmatpush2.msra.mxu0 0.0
        %728 = vmatprep.subr.mxu0 0.0
        %729 = vmatpush2.msra.mxu0 0.0
        %730 = vmatprep.subr.mxu0 0.0
        %731 = vmatpush2.msra.mxu0 0.0
        %732 = vmatprep.subr.mxu0 0.0
        %733 = vmatpush2.msra.mxu0 0.0
        %734 = vmatprep.mubr.f32.mxu0 0.0
        %735 = vmatmul.mubr.f32.gmra.mxu0 %v665
        %v736 = vpop.f32.mrf.mxu0
        %v737 = vadd.f32 %v661, %v736
        %v738 = vpop.f32.mrf.mxu0
        %739 = vdwg.mxu0
        %v740 = vld [vmem:[%s6] sm:$0xf]
        %742 = vset.pattern.permute.xlu0 0
        %743 = vperm.xlu0 %742, %v740
        %v744 = vpop.permute.xlu0 %743
        %v746 = vadd.f32 %v737, %v744
        %v747 = vmax.f32 %v746, 0.0
        %v748 = vld [vmem:[%s7] sm:$0xf]
        %750 = vset.pattern.permute.xlu0 0
        %751 = vperm.xlu0 %750, %v748
        %v752 = vpop.permute.xlu0 %751
        %v754 = vmul.f32 %v747, %v752
        %v755 = vsel %vm590, %v754, 0.0
        %v756 = vrot.slane %v755, 4
        %v757 = vadd.f32 %v755, %v756
        %v758 = vrot.slane %v757, 2
        %v759 = vadd.f32 %v757, %v758
        %v760 = vrot.slane %v759, 1
        %v761 = vadd.f32 %v759, %v760
        %762 = vst [vmem:[%s350] sm:$0x1] %v761
        %s763 = sand.u32 %s214, 1
        %s764 = scalar_lea.sflag [#allocation4], %s763
        %s765 = sand.u32 %s214, 1
        %s766 = scalar_lea.vmem [#allocation7], %s765
        // Predicated region
        $region61: #{tpu_custom_call.1} parent=51 // pred_check
          %p767 = pneg %p224
        $region62: #{tpu_custom_call.1} parent=51 // pred_check_branch
          %769 = sbr.rel (%p767) target = $region64
        $region63: #{tpu_custom_call.1} parent=51 // pred_region
          %s771 = ssub.s32 16, 16
          %772 = vsyncadd %s764, %s771
          %s773 = smul.addr %s28, 16
          %s774 = scalar_lea.hbm %s8, %s773
          %s776 = sshll.u32 %s766, 4
          %s777 = int_to_ptr.vmem [resolvable:$true] %s776
          %779 = dma.vmem_to_hbm [thread:$0]  %s777, 16, %s774, %s764
        $region64: #{tpu_custom_call.1} parent=51 // pred_fallthru
          _
      $region52: #{tpu_custom_call.1} parent=5 // pred_fallthru
        _
      %p780 = scmp.le.s32.totalorder 2, %s23
      // Predicated region
      $region65: #{tpu_custom_call.1} parent=5 // pred_check
        %p781 = pneg %p780
      $region66: #{tpu_custom_call.1} parent=5 // pred_check_branch
        %783 = sbr.rel (%p781) target = $region68
      $region67: #{tpu_custom_call.1} parent=5 // pred_region
        %s784 = ssub.s32 %s23, 2
        // Predicated region
        $region69: #{tpu_custom_call.1} parent=67 // pred_check
          %p785 = pneg %p230
        $region70: #{tpu_custom_call.1} parent=67 // pred_check_branch
          %787 = sbr.rel (%p785) target = $region72
        $region71: #{tpu_custom_call.1} parent=67 // pred_region
          %s788 = sand.u32 %s215, 1
          %s789 = scalar_lea.sflag [#allocation4], %s788
          %s790 = sand.u32 %s215, 1
          %s791 = scalar_lea.vmem [#allocation7], %s790
          %792 = dma.done %s789, 16
        $region72: #{tpu_custom_call.1} parent=67 // pred_fallthru
          _
      $region68: #{tpu_custom_call.1} parent=5 // pred_fallthru
        _
    $region6: #{tpu_custom_call.1} parent=1 // loop_footer
      %s27 = sadd.s32 1, %s23
    $region7: #{tpu_custom_call.1} parent=1 // loop_footer_branch
      %22 = sbr.rel target = $region3
    $region8: #{tpu_custom_call.1} parent=1 // loop_exit
      _
    %793 = vsyncpa [#allocation3], 1
    %s794 = scalar_lea.sflag [#allocation3], 1
    %795 = vsyncpa %s794, 1
    %796 = vsyncpa [#allocation6], 1
    %s797 = scalar_lea.sflag [#allocation6], 1
    %798 = vsyncpa %s797, 1
    %799 = vsyncpa [#allocation4], 1
    %s800 = scalar_lea.sflag [#allocation4], 1
    %801 = vsyncpa %s800, 1

</llo_original>
